<compile_context>
chip_gen: v7x
topology: tpu7x:2x2x1
jax: 0.10.0
libtpu: 0.0.40
codegen_flags: <defaults>
</compile_context>

<pallas_src>
import functools

import jax
import jax.numpy as jnp
from jax import lax
from jax.experimental import pallas as pl
from jax.experimental.pallas import tpu as pltpu


def _round_up(x, m):
    return ((x + m - 1) // m) * m


def _default_num_cores():
    # Only v7x has 2 TensorCores per chip; on single-TC v5e/v6e an extra
    # "parallel" slice just iterates sequentially and buys nothing.
    try:
        kind = jax.devices()[0].device_kind.lower()
    except Exception:
        return 1
    return 2 if "v7" in kind else 1


def _quantile_loss_kernel(preds_ref, target_ref, out_ref, *, q1, q2, threshold,
                          tile_m, m_total, tiles_per_core):
    c = pl.program_id(0)          # core-slice axis ("parallel")
    i = pl.program_id(1)          # row-tile axis within the slice ("arbitrary")

    # Zero this slice's resident (1, 8, N) accumulator at the start of its
    # reduction axis.
    @pl.when(i == 0)
    def _():
        out_ref[...] = jnp.zeros_like(out_ref)

    block_row = c * tiles_per_core + i
    row_start = block_row * tile_m
    n = out_ref.shape[-1]

    def pinball():
        # errors = target - preds, computed in f32 regardless of input dtype.
        e = target_ref[...].astype(jnp.float32) - preds_ref[...].astype(jnp.float32)
        # q = q1 where |e| <= threshold else q2
        w = jnp.where(jnp.abs(e) <= jnp.float32(threshold),
                      jnp.float32(q1), jnp.float32(q2))
        # pinball:  q*max(e,0) + (1-q)*max(-e,0)  ==  e*q - min(e, 0)
        return e * w - jnp.minimum(e, jnp.float32(0.0))

    def accumulate(contrib):
        # Fold the tile's sublane groups onto the resident (8, N) partial with
        # pure vreg adds (no per-step cross-sublane XLU reduce, no scalar RMW).
        out_ref[...] += jnp.sum(contrib.reshape(tile_m // 8, 8, n), axis=0)[None]

    # Fast path: block fully inside the array -> no per-element tail mask.
    @pl.when(row_start + tile_m <= m_total)
    def _():
        accumulate(pinball())

    # Tail path: block overlaps the end of the array -> mask rows past the end
    # with a select (pad garbage cannot propagate).  Blocks entirely past the
    # end (clamped duplicates in degenerate configs only) match neither
    # predicate and skip compute altogether.
    @pl.when(jnp.logical_and(row_start < m_total, row_start + tile_m > m_total))
    def _():
        contrib = pinball()
        row_ids = row_start + lax.broadcasted_iota(jnp.int32, contrib.shape, 0)
        accumulate(jnp.where(row_ids < m_total, contrib, jnp.float32(0.0)))


def custom_quantile_loss(preds, target, q1=0.06, q2=0.6, threshold=0.001,
                         tile_m=None, num_cores=None):
    """Pallas TPU CustomQuantileLoss.forward: returns the scalar mean pinball loss."""
    assert preds.shape == target.shape
    M, N = preds.shape
    itemsize = max(preds.dtype.itemsize, target.dtype.itemsize)

    if num_cores is None:
        num_cores = _default_num_cores()

    # VMEM budget: keep each input block <= 2 MiB so the pipeline's
    # 2 inputs x 2 buffers stays <= 8 MiB, safely under every generation's
    # default scoped-VMEM limit (v5e's 16 MiB is the tightest).
    max_block_bytes = 2 * 1024 * 1024
    budget_rows = max(8, (max_block_bytes // (N * itemsize)) // 8 * 8)
    if tile_m is None:
        tile_m = budget_rows
    tile_m = max(8, min(_round_up(tile_m, 8), budget_rows, _round_up(M, 8)))

    # Tiny inputs are pure per-step overhead: collapse to a single core slice
    # (usually a single grid step).  Otherwise split the rows EVENLY across the
    # core slices so no slice re-reads data another slice already covered.
    num_cores_eff = num_cores
    if M * N * itemsize <= 512 * 1024 or M < 8 * num_cores:
        num_cores_eff = 1

    rows_per_core = _round_up(pl.cdiv(M, num_cores_eff), 8)
    tile_m = min(tile_m, rows_per_core)
    tiles_per_core = pl.cdiv(rows_per_core, tile_m)
    tile_m = _round_up(pl.cdiv(rows_per_core, tiles_per_core), 8)

    # Highest block index that still overlaps real rows; indices past it (only
    # possible in degenerate configs) get clamped here and compute-skipped in
    # the kernel.
    num_row_blocks = pl.cdiv(M, tile_m)

    def row_map(c, i):
        return (jnp.minimum(c * tiles_per_core + i, num_row_blocks - 1), 0)

    kernel = functools.partial(
        _quantile_loss_kernel, q1=q1, q2=q2, threshold=threshold,
        tile_m=tile_m, m_total=M, tiles_per_core=tiles_per_core)

    partials = pl.pallas_call(
        kernel,
        out_shape=jax.ShapeDtypeStruct((num_cores_eff, 8, N), jnp.float32),
        grid_spec=pltpu.PrefetchScalarGridSpec(
            num_scalar_prefetch=0,
            grid=(num_cores_eff, tiles_per_core),
            in_specs=[
                pl.BlockSpec((tile_m, N), row_map),
                pl.BlockSpec((tile_m, N), row_map),
            ],
            # Output block depends only on the parallel axis -> resident
            # accumulator across the inner reduction axis; one block per core
            # slice, so the parallel axis is race-free.
            out_specs=pl.BlockSpec((1, 8, N), lambda c, i: (c, 0, 0)),
        ),
        compiler_params=pltpu.CompilerParams(
            dimension_semantics=("parallel", "arbitrary"),
        ),
        cost_estimate=pl.CostEstimate(
            flops=6 * M * N,
            transcendentals=0,
            bytes_accessed=2 * M * N * itemsize + num_cores_eff * 8 * N * 4,
        ),
    )(preds, target)

    # Final cross-sublane/cross-lane/cross-slice reduce + mean, once, in the
    # wrapper (tiny; XLA fuses it).
    return jnp.sum(partials) / jnp.float32(M * N)


def _reference_loss(preds, target, q1=0.06, q2=0.6, threshold=0.001):
    e = target.astype(jnp.float32) - preds.astype(jnp.float32)
    q = jnp.where(jnp.abs(e) <= threshold, q1, q2)
    contrib = q * jnp.maximum(e, 0.0) + (1.0 - q) * jnp.maximum(-e, 0.0)
    return jnp.mean(contrib)


if __name__ == "__main__":
    key = jax.random.PRNGKey(0)
    k1, k2, k3, k4, k5, k6 = jax.random.split(key, 6)

    # Production-like shape from the module (a 250-row prediction slab):
    # collapses to a single grid step with a masked tail.
    M, N = 250, 128
    preds = jax.random.normal(k1, (M, N), dtype=jnp.float32) * 0.01
    target = jax.random.normal(k2, (M, N), dtype=jnp.float32) * 0.01
    loss = jax.block_until_ready(custom_quantile_loss(preds, target))
    ref = jax.block_until_ready(_reference_loss(preds, target))
    assert jnp.allclose(loss, ref, rtol=1e-5, atol=1e-7), (loss, ref)

    # Larger shape with the default (generation-detected) core count.
    M2, N2 = 1000, 256
    preds2 = jax.random.normal(k3, (M2, N2), dtype=jnp.float32) * 0.01
    target2 = jax.random.normal(k4, (M2, N2), dtype=jnp.float32) * 0.01
    loss2 = jax.block_until_ready(custom_quantile_loss(preds2, target2))
    ref2 = jax.block_until_ready(_reference_loss(preds2, target2))
    assert jnp.allclose(loss2, ref2, rtol=1e-5, atol=1e-7), (loss2, ref2)

    # Multi-tile + explicit 2-way even core split + tail tile: exercises the
    # "parallel" axis and both kernel paths even on single-TC chips.
    loss3 = jax.block_until_ready(
        custom_quantile_loss(preds2, target2, tile_m=128, num_cores=2))
    assert jnp.allclose(loss3, ref2, rtol=1e-5, atol=1e-7), (loss3, ref2)

    # Odd row count: single tile with a masked tail.
    M4, N4 = 77, 128
    preds4 = jax.random.normal(k5, (M4, N4), dtype=jnp.float32) * 0.01
    target4 = jax.random.normal(k6, (M4, N4), dtype=jnp.float32) * 0.01
    loss4 = jax.block_until_ready(custom_quantile_loss(preds4, target4))
    ref4 = jax.block_until_ready(_reference_loss(preds4, target4))
    assert jnp.allclose(loss4, ref4, rtol=1e-5, atol=1e-7), (loss4, ref4)

    print("KERNEL_OK")
</pallas_src>

<mosaic_0001>
module attributes {stable_mosaic.version = 11 : i64} {
  func.func @_quantile_loss_kernel(%arg0: i32, %arg1: i32, %arg2: memref<256x128xf32, #tpu.memory_space<vmem>>, %arg3: memref<256x128xf32, #tpu.memory_space<vmem>>, %arg4: memref<1x8x128xf32, #tpu.memory_space<vmem>>) attributes {dimension_semantics = [#tpu.dimension_semantics<parallel>, #tpu.dimension_semantics<arbitrary>], iteration_bounds = array<i64: 1, 1>, scalar_prefetch = 0 : i64, scratch_operands = 0 : i64, tpu.core_type = #tpu.core_type<tc>, window_params = [{transform_indices = @transform_0, window_bounds = array<i64: 256, 128>}, {transform_indices = @transform_1, window_bounds = array<i64: 256, 128>}, {transform_indices = @transform_2, window_bounds = array<i64: 1, 8, 128>}]} {
    %c0_i32 = arith.constant 0 : i32
    %0 = arith.cmpi eq, %arg1, %c0_i32 : i32
    %1 = arith.extui %0 : i1 to i32
    %c0_i32_0 = arith.constant 0 : i32
    %2 = arith.cmpi ne, %1, %c0_i32_0 : i32
    scf.if %2 {
      %cst = arith.constant 0.000000e+00 : f32
      %16 = vector.broadcast %cst : f32 to vector<1x8x128xf32>
      %c0 = arith.constant 0 : index
      %c0_7 = arith.constant 0 : index
      %c0_8 = arith.constant 0 : index
      %17 = vector.load %arg4[%c0, %c0_7, %c0_8] : memref<1x8x128xf32, #tpu.memory_space<vmem>>, vector<1x8x128xf32>
      tpu.vector_store %arg4[%c0, %c0_7, %c0_8], %16 {strides = array<i32>} : memref<1x8x128xf32, #tpu.memory_space<vmem>>, vector<1x8x128xf32>,
    } else {
    }
    %c1_i32 = arith.constant 1 : i32
    %3 = arith.muli %arg0, %c1_i32 : i32
    %4 = arith.addi %3, %arg1 : i32
    %c256_i32 = arith.constant 256 : i32
    %5 = arith.muli %4, %c256_i32 : i32
    %c256_i32_1 = arith.constant 256 : i32
    %6 = arith.addi %5, %c256_i32_1 : i32
    %c250_i32 = arith.constant 250 : i32
    %7 = arith.cmpi sle, %6, %c250_i32 : i32
    %8 = arith.extui %7 : i1 to i32
    %c0_i32_2 = arith.constant 0 : i32
    %9 = arith.cmpi ne, %8, %c0_i32_2 : i32
    scf.if %9 {
      %c0 = arith.constant 0 : index
      %c0_7 = arith.constant 0 : index
      %16 = vector.load %arg3[%c0, %c0_7] : memref<256x128xf32, #tpu.memory_space<vmem>>, vector<256x128xf32>
      %c0_8 = arith.constant 0 : index
      %c0_9 = arith.constant 0 : index
      %17 = vector.load %arg2[%c0_8, %c0_9] : memref<256x128xf32, #tpu.memory_space<vmem>>, vector<256x128xf32>
      %18 = arith.subf %16, %17 : vector<256x128xf32>
      %19 = math.absf %18 : vector<256x128xf32>
      %cst = arith.constant 1.000000e-03 : f32
      %20 = vector.broadcast %cst : f32 to vector<256x128xf32>
      %21 = arith.cmpf ole, %19, %20 : vector<256x128xf32>
      %cst_10 = arith.constant 6.000000e-02 : f32
      %cst_11 = arith.constant 6.000000e-01 : f32
      %22 = vector.broadcast %cst_10 : f32 to vector<256x128xf32>
      %23 = vector.broadcast %cst_11 : f32 to vector<256x128xf32>
      %24 = arith.select %21, %22, %23 : vector<256x128xi1>, vector<256x128xf32>
      %25 = arith.mulf %18, %24 : vector<256x128xf32>
      %cst_12 = arith.constant 0.000000e+00 : f32
      %26 = vector.broadcast %cst_12 : f32 to vector<256x128xf32>
      %27 = arith.minimumf %18, %26 : vector<256x128xf32>
      %28 = arith.subf %25, %27 : vector<256x128xf32>
      %c0_13 = arith.constant 0 : index
      %c0_14 = arith.constant 0 : index
      %c0_15 = arith.constant 0 : index
      %29 = vector.load %arg4[%c0_13, %c0_14, %c0_15] : memref<1x8x128xf32, #tpu.memory_space<vmem>>, vector<1x8x128xf32>
      %30 = vector.shape_cast %28 : vector<256x128xf32> to vector<32x8x128xf32>
      %cst_16 = arith.constant dense<0.000000e+00> : vector<8x128xf32>
      %31 = vector.multi_reduction <add>, %30, %cst_16 [0] : vector<32x8x128xf32> to vector<8x128xf32>
      %32 = vector.shape_cast %31 : vector<8x128xf32> to vector<1x8x128xf32>
      %33 = arith.addf %29, %32 : vector<1x8x128xf32>
      %c0_17 = arith.constant 0 : index
      %c0_18 = arith.constant 0 : index
      %c0_19 = arith.constant 0 : index
      %34 = vector.load %arg4[%c0_17, %c0_18, %c0_19] : memref<1x8x128xf32, #tpu.memory_space<vmem>>, vector<1x8x128xf32>
      tpu.vector_store %arg4[%c0_17, %c0_18, %c0_19], %33 {strides = array<i32>} : memref<1x8x128xf32, #tpu.memory_space<vmem>>, vector<1x8x128xf32>,
    } else {
    }
    %c250_i32_3 = arith.constant 250 : i32
    %10 = arith.cmpi slt, %5, %c250_i32_3 : i32
    %c256_i32_4 = arith.constant 256 : i32
    %11 = arith.addi %5, %c256_i32_4 : i32
    %c250_i32_5 = arith.constant 250 : i32
    %12 = arith.cmpi sgt, %11, %c250_i32_5 : i32
    %13 = arith.andi %10, %12 : i1
    %14 = arith.extui %13 : i1 to i32
    %c0_i32_6 = arith.constant 0 : i32
    %15 = arith.cmpi ne, %14, %c0_i32_6 : i32
    scf.if %15 {
      %c0 = arith.constant 0 : index
      %c0_7 = arith.constant 0 : index
      %16 = vector.load %arg3[%c0, %c0_7] : memref<256x128xf32, #tpu.memory_space<vmem>>, vector<256x128xf32>
      %c0_8 = arith.constant 0 : index
      %c0_9 = arith.constant 0 : index
      %17 = vector.load %arg2[%c0_8, %c0_9] : memref<256x128xf32, #tpu.memory_space<vmem>>, vector<256x128xf32>
      %18 = arith.subf %16, %17 : vector<256x128xf32>
      %19 = math.absf %18 : vector<256x128xf32>
      %cst = arith.constant 1.000000e-03 : f32
      %20 = vector.broadcast %cst : f32 to vector<256x128xf32>
      %21 = arith.cmpf ole, %19, %20 : vector<256x128xf32>
      %cst_10 = arith.constant 6.000000e-02 : f32
      %cst_11 = arith.constant 6.000000e-01 : f32
      %22 = vector.broadcast %cst_10 : f32 to vector<256x128xf32>
      %23 = vector.broadcast %cst_11 : f32 to vector<256x128xf32>
      %24 = arith.select %21, %22, %23 : vector<256x128xi1>, vector<256x128xf32>
      %25 = arith.mulf %18, %24 : vector<256x128xf32>
      %cst_12 = arith.constant 0.000000e+00 : f32
      %26 = vector.broadcast %cst_12 : f32 to vector<256x128xf32>
      %27 = arith.minimumf %18, %26 : vector<256x128xf32>
      %28 = arith.subf %25, %27 : vector<256x128xf32>
      %29 = tpu.iota {dimensions = array<i32: 0>} : vector<256x128xi32>
      %30 = vector.broadcast %5 : i32 to vector<256x128xi32>
      %31 = arith.addi %30, %29 : vector<256x128xi32>
      %c250_i32_13 = arith.constant 250 : i32
      %32 = vector.broadcast %c250_i32_13 : i32 to vector<256x128xi32>
      %33 = arith.cmpi slt, %31, %32 : vector<256x128xi32>
      %cst_14 = arith.constant 0.000000e+00 : f32
      %34 = vector.broadcast %cst_14 : f32 to vector<256x128xf32>
      %35 = arith.select %33, %28, %34 : vector<256x128xi1>, vector<256x128xf32>
      %c0_15 = arith.constant 0 : index
      %c0_16 = arith.constant 0 : index
      %c0_17 = arith.constant 0 : index
      %36 = vector.load %arg4[%c0_15, %c0_16, %c0_17] : memref<1x8x128xf32, #tpu.memory_space<vmem>>, vector<1x8x128xf32>
      %37 = vector.shape_cast %35 : vector<256x128xf32> to vector<32x8x128xf32>
      %cst_18 = arith.constant dense<0.000000e+00> : vector<8x128xf32>
      %38 = vector.multi_reduction <add>, %37, %cst_18 [0] : vector<32x8x128xf32> to vector<8x128xf32>
      %39 = vector.shape_cast %38 : vector<8x128xf32> to vector<1x8x128xf32>
      %40 = arith.addf %36, %39 : vector<1x8x128xf32>
      %c0_19 = arith.constant 0 : index
      %c0_20 = arith.constant 0 : index
      %c0_21 = arith.constant 0 : index
      %41 = vector.load %arg4[%c0_19, %c0_20, %c0_21] : memref<1x8x128xf32, #tpu.memory_space<vmem>>, vector<1x8x128xf32>
      tpu.vector_store %arg4[%c0_19, %c0_20, %c0_21], %40 {strides = array<i32>} : memref<1x8x128xf32, #tpu.memory_space<vmem>>, vector<1x8x128xf32>,
    } else {
    }
    return
  }
  func.func @transform_0(%arg0: i32, %arg1: i32) -> (i32, i32) {
    %c1_i32 = arith.constant 1 : i32
    %0 = arith.muli %arg0, %c1_i32 : i32
    %1 = arith.addi %0, %arg1 : i32
    %c0_i32 = arith.constant 0 : i32
    %2 = arith.minsi %1, %c0_i32 : i32
    %c0_i32_0 = arith.constant 0 : i32
    %c0_i32_1 = arith.constant 0 : i32
    return %2, %c0_i32_0 : i32, i32
  }
  func.func @transform_1(%arg0: i32, %arg1: i32) -> (i32, i32) {
    %c1_i32 = arith.constant 1 : i32
    %0 = arith.muli %arg0, %c1_i32 : i32
    %1 = arith.addi %0, %arg1 : i32
    %c0_i32 = arith.constant 0 : i32
    %2 = arith.minsi %1, %c0_i32 : i32
    %c0_i32_0 = arith.constant 0 : i32
    %c0_i32_1 = arith.constant 0 : i32
    return %2, %c0_i32_0 : i32, i32
  }
  func.func @transform_2(%arg0: i32, %arg1: i32) -> (i32, i32, i32) {
    %c0_i32 = arith.constant 0 : i32
    %c0_i32_0 = arith.constant 0 : i32
    %c0_i32_1 = arith.constant 0 : i32
    return %arg0, %c0_i32, %c0_i32_0 : i32, i32, i32
  }
}

</mosaic_0001>

<llo_original>
// kernel: tpu_custom_call.1
$region0: #{tpu_custom_call.1}
  #allocation0 [shape = 'u32[]', space=smem, size = 0x4, offset = 0x4, fixed_abs, tag = 'smem constant byte address 0x4 - core index']
  #allocation1 [shape = 'u32[144,128]{1,0:T(1,128)}', space=vmem, size = 0x12000, scoped, tag = 'internal scratch']
  %s0 = inlined_call_operand.hbm [shape: f32[250,128], index: 0, kind: input, shape index: {}]
  %s1 = inlined_call_operand.hbm [shape: f32[250,128], index: 1, kind: input, shape index: {}]
  %s2 = inlined_call_operand.hbm [shape: f32[1,8,128], index: 2, kind: output, shape index: {}]
  %s3 = sld [smem:[#allocation0]]
  $region38: #{tpu_custom_call.1} parent=0
    _
  %s5 = ssub.s32 1, %s3
  %s6 = scalar_select 0, %s5, %s3
  $region1: #{tpu_custom_call.1} parent=0
    #allocation2 [shape = 'u8[131072]{0}', space=vmem, size = 0x20000, scoped, tag = 'input window, operand 0, single buffered']
    #allocation3 [shape = 's32[1]{0}', space=sflag, size = 0x4, scoped, tag = 'scoped memory for tpu_custom_call.1']
    #allocation4 [shape = 's32[1]{0}', space=sflag, size = 0x4, scoped, tag = 'scoped memory for tpu_custom_call.1']
    #allocation5 [shape = 'u8[131072]{0}', space=vmem, size = 0x20000, scoped, tag = 'input window, operand 1, single buffered']
    #allocation6 [shape = 's32[1]{0}', space=sflag, size = 0x4, scoped, tag = 'scoped memory for tpu_custom_call.1']
    #allocation7 [shape = 'u8[4096]{0}', space=vmem, size = 0x1000, scoped, tag = 'output window, operand 0, single buffered']
    %7 = vsyncpa [#allocation3], 0
    %8 = vsyncpa [#allocation6], 0
    %9 = vsyncpa [#allocation4], 0
    // Predicated region
    $region2: #{tpu_custom_call.1} parent=1 // pred_check
      _
    $region3: #{tpu_custom_call.1} parent=1 // pred_check_branch
      %11 = sbr.rel (0) target = $region5
    $region4: #{tpu_custom_call.1} parent=1 // pred_region
      %s12 = sadd.s32 0, 0
      %p13 = scmp.lt.s32.totalorder %s12, 0
      %s14 = scalar_select %p13, %s12, 0
      %s15 = smul.u32 32, %s14
      %s17 = ssub.s32 4096, 4096
      %18 = vsyncadd [#allocation3], %s17
      %s19 = smul.addr %s15, 128
      %s20 = scalar_lea.hbm %s0, %s19
      %s21 = sshll.u32 [#allocation2], 4
      %s22 = int_to_ptr.vmem [resolvable:$true] %s21
      %27 = dma.hbm_to_vmem [thread:$0]  %s20, 4096, %s22, [#allocation3], 128, 128, 8
    $region5: #{tpu_custom_call.1} parent=1 // pred_fallthru
      _
    // Predicated region
    $region6: #{tpu_custom_call.1} parent=1 // pred_check
      _
    $region7: #{tpu_custom_call.1} parent=1 // pred_check_branch
      %29 = sbr.rel (0) target = $region9
    $region8: #{tpu_custom_call.1} parent=1 // pred_region
      %s30 = sadd.s32 0, 0
      %p31 = scmp.lt.s32.totalorder %s30, 0
      %s32 = scalar_select %p31, %s30, 0
      %s33 = smul.u32 32, %s32
      %s35 = ssub.s32 4096, 4096
      %36 = vsyncadd [#allocation6], %s35
      %s37 = smul.addr %s33, 128
      %s38 = scalar_lea.hbm %s1, %s37
      %s39 = sshll.u32 [#allocation5], 4
      %s40 = int_to_ptr.vmem [resolvable:$true] %s39
      %45 = dma.hbm_to_vmem [thread:$0]  %s38, 4096, %s40, [#allocation6], 128, 128, 8
    $region9: #{tpu_custom_call.1} parent=1 // pred_fallthru
      _
    // Predicated region
    $region10: #{tpu_custom_call.1} parent=1 // pred_check
      _
    $region11: #{tpu_custom_call.1} parent=1 // pred_check_branch
      %47 = sbr.rel (0) target = $region13
    $region12: #{tpu_custom_call.1} parent=1 // pred_region
      %48 = dma.done [#allocation3], 4096
    $region13: #{tpu_custom_call.1} parent=1 // pred_fallthru
      _
    // Predicated region
    $region14: #{tpu_custom_call.1} parent=1 // pred_check
      _
    $region15: #{tpu_custom_call.1} parent=1 // pred_check_branch
      %50 = sbr.rel (0) target = $region17
    $region16: #{tpu_custom_call.1} parent=1 // pred_region
      %51 = dma.done [#allocation6], 4096
    $region17: #{tpu_custom_call.1} parent=1 // pred_fallthru
      _
    %s52 = sadd.s32 0, 0
    %p53 = scmp.lt.s32.totalorder %s52, 0
    %s54 = scalar_select %p53, %s52, 0
    %s55 = smul.u32 32, %s54
    %s56 = sadd.s32 0, 0
    %p57 = scmp.lt.s32.totalorder %s56, 0
    %s58 = scalar_select %p57, %s56, 0
    %s59 = smul.u32 32, %s58
    %p60 = scmp.eq.s32.totalorder 0, 0
    // Predicated region
    $region18: #{tpu_custom_call.1} parent=1 // pred_check
      %p61 = pneg %p60
    $region19: #{tpu_custom_call.1} parent=1 // pred_check_branch
      %63 = sbr.rel (%p61) target = $region21
    $region20: #{tpu_custom_call.1} parent=1 // pred_region
      %64 = vst [vmem:[#allocation7] sm:$0xff] 0.0
    $region21: #{tpu_custom_call.1} parent=1 // pred_fallthru
      _
    %s65 = sadd.s32 0, 0
    %s66 = smul.u32 %s65, 256
    %s67 = sadd.s32 %s66, 256
    %p68 = scmp.le.s32.totalorder %s67, 250
    // Predicated region
    $region22: #{tpu_custom_call.1} parent=1 // pred_check
      %p69 = pneg %p68
    $region23: #{tpu_custom_call.1} parent=1 // pred_check_branch
      %71 = sbr.rel (%p69) target = $region25
    $region24: #{tpu_custom_call.1} parent=1 // pred_region
      %v72 = vld [vmem:[#allocation5] sm:$0xff]
      %v73 = vld [vmem:[#allocation5 + $0x8] sm:$0xff]
      %v74 = vld [vmem:[#allocation5 + $0x10] sm:$0xff]
      %v75 = vld [vmem:[#allocation5 + $0x18] sm:$0xff]
      %v76 = vld [vmem:[#allocation5 + $0x20] sm:$0xff]
      %v77 = vld [vmem:[#allocation5 + $0x28] sm:$0xff]
      %v78 = vld [vmem:[#allocation5 + $0x30] sm:$0xff]
      %v79 = vld [vmem:[#allocation5 + $0x38] sm:$0xff]
      %v80 = vld [vmem:[#allocation5 + $0x40] sm:$0xff]
      %v81 = vld [vmem:[#allocation5 + $0x48] sm:$0xff]
      %v82 = vld [vmem:[#allocation5 + $0x50] sm:$0xff]
      %v83 = vld [vmem:[#allocation5 + $0x58] sm:$0xff]
      %v84 = vld [vmem:[#allocation5 + $0x60] sm:$0xff]
      %v85 = vld [vmem:[#allocation5 + $0x68] sm:$0xff]
      %v86 = vld [vmem:[#allocation5 + $0x70] sm:$0xff]
      %v87 = vld [vmem:[#allocation5 + $0x78] sm:$0xff]
      %v88 = vld [vmem:[#allocation5 + $0x80] sm:$0xff]
      %v89 = vld [vmem:[#allocation5 + $0x88] sm:$0xff]
      %v90 = vld [vmem:[#allocation5 + $0x90] sm:$0xff]
      %v91 = vld [vmem:[#allocation5 + $0x98] sm:$0xff]
      %v92 = vld [vmem:[#allocation5 + $0xa0] sm:$0xff]
      %v93 = vld [vmem:[#allocation5 + $0xa8] sm:$0xff]
      %v94 = vld [vmem:[#allocation5 + $0xb0] sm:$0xff]
      %v95 = vld [vmem:[#allocation5 + $0xb8] sm:$0xff]
      %v96 = vld [vmem:[#allocation5 + $0xc0] sm:$0xff]
      %v97 = vld [vmem:[#allocation5 + $0xc8] sm:$0xff]
      %v98 = vld [vmem:[#allocation5 + $0xd0] sm:$0xff]
      %v99 = vld [vmem:[#allocation5 + $0xd8] sm:$0xff]
      %v100 = vld [vmem:[#allocation5 + $0xe0] sm:$0xff]
      %v101 = vld [vmem:[#allocation5 + $0xe8] sm:$0xff]
      %v102 = vld [vmem:[#allocation5 + $0xf0] sm:$0xff]
      %v103 = vld [vmem:[#allocation5 + $0xf8] sm:$0xff]
      %v104 = vld [vmem:[#allocation2] sm:$0xff]
      %v105 = vld [vmem:[#allocation2 + $0x8] sm:$0xff]
      %v106 = vld [vmem:[#allocation2 + $0x10] sm:$0xff]
      %v107 = vld [vmem:[#allocation2 + $0x18] sm:$0xff]
      %v108 = vld [vmem:[#allocation2 + $0x20] sm:$0xff]
      %v109 = vld [vmem:[#allocation2 + $0x28] sm:$0xff]
      %v110 = vld [vmem:[#allocation2 + $0x30] sm:$0xff]
      %v111 = vld [vmem:[#allocation2 + $0x38] sm:$0xff]
      %v112 = vld [vmem:[#allocation2 + $0x40] sm:$0xff]
      %v113 = vld [vmem:[#allocation2 + $0x48] sm:$0xff]
      %v114 = vld [vmem:[#allocation2 + $0x50] sm:$0xff]
      %v115 = vld [vmem:[#allocation2 + $0x58] sm:$0xff]
      %v116 = vld [vmem:[#allocation2 + $0x60] sm:$0xff]
      %v117 = vld [vmem:[#allocation2 + $0x68] sm:$0xff]
      %v118 = vld [vmem:[#allocation2 + $0x70] sm:$0xff]
      %v119 = vld [vmem:[#allocation2 + $0x78] sm:$0xff]
      %v120 = vld [vmem:[#allocation2 + $0x80] sm:$0xff]
      %v121 = vld [vmem:[#allocation2 + $0x88] sm:$0xff]
      %v122 = vld [vmem:[#allocation2 + $0x90] sm:$0xff]
      %v123 = vld [vmem:[#allocation2 + $0x98] sm:$0xff]
      %v124 = vld [vmem:[#allocation2 + $0xa0] sm:$0xff]
      %v125 = vld [vmem:[#allocation2 + $0xa8] sm:$0xff]
      %v126 = vld [vmem:[#allocation2 + $0xb0] sm:$0xff]
      %v127 = vld [vmem:[#allocation2 + $0xb8] sm:$0xff]
      %v128 = vld [vmem:[#allocation2 + $0xc0] sm:$0xff]
      %v129 = vld [vmem:[#allocation2 + $0xc8] sm:$0xff]
      %v130 = vld [vmem:[#allocation2 + $0xd0] sm:$0xff]
      %v131 = vld [vmem:[#allocation2 + $0xd8] sm:$0xff]
      %v132 = vld [vmem:[#allocation2 + $0xe0] sm:$0xff]
      %v133 = vld [vmem:[#allocation2 + $0xe8] sm:$0xff]
      %v134 = vld [vmem:[#allocation2 + $0xf0] sm:$0xff]
      %v135 = vld [vmem:[#allocation2 + $0xf8] sm:$0xff]
      %v136 = vsub.f32 %v72, %v104
      %v137 = vsub.f32 %v73, %v105
      %v138 = vsub.f32 %v74, %v106
      %v139 = vsub.f32 %v75, %v107
      %v140 = vsub.f32 %v76, %v108
      %v141 = vsub.f32 %v77, %v109
      %v142 = vsub.f32 %v78, %v110
      %v143 = vsub.f32 %v79, %v111
      %v144 = vsub.f32 %v80, %v112
      %v145 = vsub.f32 %v81, %v113
      %v146 = vsub.f32 %v82, %v114
      %v147 = vsub.f32 %v83, %v115
      %v148 = vsub.f32 %v84, %v116
      %v149 = vsub.f32 %v85, %v117
      %v150 = vsub.f32 %v86, %v118
      %v151 = vsub.f32 %v87, %v119
      %v152 = vsub.f32 %v88, %v120
      %v153 = vsub.f32 %v89, %v121
      %v154 = vsub.f32 %v90, %v122
      %v155 = vsub.f32 %v91, %v123
      %v156 = vsub.f32 %v92, %v124
      %v157 = vsub.f32 %v93, %v125
      %v158 = vsub.f32 %v94, %v126
      %v159 = vsub.f32 %v95, %v127
      %v160 = vsub.f32 %v96, %v128
      %v161 = vsub.f32 %v97, %v129
      %v162 = vsub.f32 %v98, %v130
      %v163 = vsub.f32 %v99, %v131
      %v164 = vsub.f32 %v100, %v132
      %v165 = vsub.f32 %v101, %v133
      %v166 = vsub.f32 %v102, %v134
      %v167 = vsub.f32 %v103, %v135
      %v168 = vand.u32 2147483647, %v136
      %v169 = vand.u32 2147483647, %v137
      %v170 = vand.u32 2147483647, %v138
      %v171 = vand.u32 2147483647, %v139
      %v172 = vand.u32 2147483647, %v140
      %v173 = vand.u32 2147483647, %v141
      %v174 = vand.u32 2147483647, %v142
      %v175 = vand.u32 2147483647, %v143
      %v176 = vand.u32 2147483647, %v144
      %v177 = vand.u32 2147483647, %v145
      %v178 = vand.u32 2147483647, %v146
      %v179 = vand.u32 2147483647, %v147
      %v180 = vand.u32 2147483647, %v148
      %v181 = vand.u32 2147483647, %v149
      %v182 = vand.u32 2147483647, %v150
      %v183 = vand.u32 2147483647, %v151
      %v184 = vand.u32 2147483647, %v152
      %v185 = vand.u32 2147483647, %v153
      %v186 = vand.u32 2147483647, %v154
      %v187 = vand.u32 2147483647, %v155
      %v188 = vand.u32 2147483647, %v156
      %v189 = vand.u32 2147483647, %v157
      %v190 = vand.u32 2147483647, %v158
      %v191 = vand.u32 2147483647, %v159
      %v192 = vand.u32 2147483647, %v160
      %v193 = vand.u32 2147483647, %v161
      %v194 = vand.u32 2147483647, %v162
      %v195 = vand.u32 2147483647, %v163
      %v196 = vand.u32 2147483647, %v164
      %v197 = vand.u32 2147483647, %v165
      %v198 = vand.u32 2147483647, %v166
      %v199 = vand.u32 2147483647, %v167
      %vm200 = vcmp.le.f32.partialorder %v168, 0.001
      %vm201 = vcmp.le.f32.partialorder %v169, 0.001
      %vm202 = vcmp.le.f32.partialorder %v170, 0.001
      %vm203 = vcmp.le.f32.partialorder %v171, 0.001
      %vm204 = vcmp.le.f32.partialorder %v172, 0.001
      %vm205 = vcmp.le.f32.partialorder %v173, 0.001
      %vm206 = vcmp.le.f32.partialorder %v174, 0.001
      %vm207 = vcmp.le.f32.partialorder %v175, 0.001
      %vm208 = vcmp.le.f32.partialorder %v176, 0.001
      %vm209 = vcmp.le.f32.partialorder %v177, 0.001
      %vm210 = vcmp.le.f32.partialorder %v178, 0.001
      %vm211 = vcmp.le.f32.partialorder %v179, 0.001
      %vm212 = vcmp.le.f32.partialorder %v180, 0.001
      %vm213 = vcmp.le.f32.partialorder %v181, 0.001
      %vm214 = vcmp.le.f32.partialorder %v182, 0.001
      %vm215 = vcmp.le.f32.partialorder %v183, 0.001
      %vm216 = vcmp.le.f32.partialorder %v184, 0.001
      %vm217 = vcmp.le.f32.partialorder %v185, 0.001
      %vm218 = vcmp.le.f32.partialorder %v186, 0.001
      %vm219 = vcmp.le.f32.partialorder %v187, 0.001
      %vm220 = vcmp.le.f32.partialorder %v188, 0.001
      %vm221 = vcmp.le.f32.partialorder %v189, 0.001
      %vm222 = vcmp.le.f32.partialorder %v190, 0.001
      %vm223 = vcmp.le.f32.partialorder %v191, 0.001
      %vm224 = vcmp.le.f32.partialorder %v192, 0.001
      %vm225 = vcmp.le.f32.partialorder %v193, 0.001
      %vm226 = vcmp.le.f32.partialorder %v194, 0.001
      %vm227 = vcmp.le.f32.partialorder %v195, 0.001
      %vm228 = vcmp.le.f32.partialorder %v196, 0.001
      %vm229 = vcmp.le.f32.partialorder %v197, 0.001
      %vm230 = vcmp.le.f32.partialorder %v198, 0.001
      %vm231 = vcmp.le.f32.partialorder %v199, 0.001
      %v232 = vsel %vm200, 0.06, 0.6
      %v233 = vsel %vm201, 0.06, 0.6
      %v234 = vsel %vm202, 0.06, 0.6
      %v235 = vsel %vm203, 0.06, 0.6
      %v236 = vsel %vm204, 0.06, 0.6
      %v237 = vsel %vm205, 0.06, 0.6
      %v238 = vsel %vm206, 0.06, 0.6
      %v239 = vsel %vm207, 0.06, 0.6
      %v240 = vsel %vm208, 0.06, 0.6
      %v241 = vsel %vm209, 0.06, 0.6
      %v242 = vsel %vm210, 0.06, 0.6
      %v243 = vsel %vm211, 0.06, 0.6
      %v244 = vsel %vm212, 0.06, 0.6
      %v245 = vsel %vm213, 0.06, 0.6
      %v246 = vsel %vm214, 0.06, 0.6
      %v247 = vsel %vm215, 0.06, 0.6
      %v248 = vsel %vm216, 0.06, 0.6
      %v249 = vsel %vm217, 0.06, 0.6
      %v250 = vsel %vm218, 0.06, 0.6
      %v251 = vsel %vm219, 0.06, 0.6
      %v252 = vsel %vm220, 0.06, 0.6
      %v253 = vsel %vm221, 0.06, 0.6
      %v254 = vsel %vm222, 0.06, 0.6
      %v255 = vsel %vm223, 0.06, 0.6
      %v256 = vsel %vm224, 0.06, 0.6
      %v257 = vsel %vm225, 0.06, 0.6
      %v258 = vsel %vm226, 0.06, 0.6
      %v259 = vsel %vm227, 0.06, 0.6
      %v260 = vsel %vm228, 0.06, 0.6
      %v261 = vsel %vm229, 0.06, 0.6
      %v262 = vsel %vm230, 0.06, 0.6
      %v263 = vsel %vm231, 0.06, 0.6
      %v264 = vmul.f32 %v136, %v232
      %v265 = vmul.f32 %v137, %v233
      %v266 = vmul.f32 %v138, %v234
      %v267 = vmul.f32 %v139, %v235
      %v268 = vmul.f32 %v140, %v236
      %v269 = vmul.f32 %v141, %v237
      %v270 = vmul.f32 %v142, %v238
      %v271 = vmul.f32 %v143, %v239
      %v272 = vmul.f32 %v144, %v240
      %v273 = vmul.f32 %v145, %v241
      %v274 = vmul.f32 %v146, %v242
      %v275 = vmul.f32 %v147, %v243
      %v276 = vmul.f32 %v148, %v244
      %v277 = vmul.f32 %v149, %v245
      %v278 = vmul.f32 %v150, %v246
      %v279 = vmul.f32 %v151, %v247
      %v280 = vmul.f32 %v152, %v248
      %v281 = vmul.f32 %v153, %v249
      %v282 = vmul.f32 %v154, %v250
      %v283 = vmul.f32 %v155, %v251
      %v284 = vmul.f32 %v156, %v252
      %v285 = vmul.f32 %v157, %v253
      %v286 = vmul.f32 %v158, %v254
      %v287 = vmul.f32 %v159, %v255
      %v288 = vmul.f32 %v160, %v256
      %v289 = vmul.f32 %v161, %v257
      %v290 = vmul.f32 %v162, %v258
      %v291 = vmul.f32 %v163, %v259
      %v292 = vmul.f32 %v164, %v260
      %v293 = vmul.f32 %v165, %v261
      %v294 = vmul.f32 %v166, %v262
      %v295 = vmul.f32 %v167, %v263
      %v296 = vmin.f32 %v136, 0.0
      %v297 = vmin.f32 %v137, 0.0
      %v298 = vmin.f32 %v138, 0.0
      %v299 = vmin.f32 %v139, 0.0
      %v300 = vmin.f32 %v140, 0.0
      %v301 = vmin.f32 %v141, 0.0
      %v302 = vmin.f32 %v142, 0.0
      %v303 = vmin.f32 %v143, 0.0
      %v304 = vmin.f32 %v144, 0.0
      %v305 = vmin.f32 %v145, 0.0
      %v306 = vmin.f32 %v146, 0.0
      %v307 = vmin.f32 %v147, 0.0
      %v308 = vmin.f32 %v148, 0.0
      %v309 = vmin.f32 %v149, 0.0
      %v310 = vmin.f32 %v150, 0.0
      %v311 = vmin.f32 %v151, 0.0
      %v312 = vmin.f32 %v152, 0.0
      %v313 = vmin.f32 %v153, 0.0
      %v314 = vmin.f32 %v154, 0.0
      %v315 = vmin.f32 %v155, 0.0
      %v316 = vmin.f32 %v156, 0.0
      %v317 = vmin.f32 %v157, 0.0
      %v318 = vmin.f32 %v158, 0.0
      %v319 = vmin.f32 %v159, 0.0
      %v320 = vmin.f32 %v160, 0.0
      %v321 = vmin.f32 %v161, 0.0
      %v322 = vmin.f32 %v162, 0.0
      %v323 = vmin.f32 %v163, 0.0
      %v324 = vmin.f32 %v164, 0.0
      %v325 = vmin.f32 %v165, 0.0
      %v326 = vmin.f32 %v166, 0.0
      %v327 = vmin.f32 %v167, 0.0
      %v328 = vsub.f32 %v264, %v296
      %v329 = vsub.f32 %v265, %v297
      %v330 = vsub.f32 %v266, %v298
      %v331 = vsub.f32 %v267, %v299
      %v332 = vsub.f32 %v268, %v300
      %v333 = vsub.f32 %v269, %v301
      %v334 = vsub.f32 %v270, %v302
      %v335 = vsub.f32 %v271, %v303
      %v336 = vsub.f32 %v272, %v304
      %v337 = vsub.f32 %v273, %v305
      %v338 = vsub.f32 %v274, %v306
      %v339 = vsub.f32 %v275, %v307
      %v340 = vsub.f32 %v276, %v308
      %v341 = vsub.f32 %v277, %v309
      %v342 = vsub.f32 %v278, %v310
      %v343 = vsub.f32 %v279, %v311
      %v344 = vsub.f32 %v280, %v312
      %v345 = vsub.f32 %v281, %v313
      %v346 = vsub.f32 %v282, %v314
      %v347 = vsub.f32 %v283, %v315
      %v348 = vsub.f32 %v284, %v316
      %v349 = vsub.f32 %v285, %v317
      %v350 = vsub.f32 %v286, %v318
      %v351 = vsub.f32 %v287, %v319
      %v352 = vsub.f32 %v288, %v320
      %v353 = vsub.f32 %v289, %v321
      %v354 = vsub.f32 %v290, %v322
      %v355 = vsub.f32 %v291, %v323
      %v356 = vsub.f32 %v292, %v324
      %v357 = vsub.f32 %v293, %v325
      %v358 = vsub.f32 %v294, %v326
      %v359 = vsub.f32 %v295, %v327
      %v360 = vld [vmem:[#allocation7] sm:$0xff]
      %v361 = vadd.f32 %v328, %v329
      %v362 = vadd.f32 %v361, %v330
      %v363 = vadd.f32 %v362, %v331
      %v364 = vadd.f32 %v363, %v332
      %v365 = vadd.f32 %v364, %v333
      %v366 = vadd.f32 %v365, %v334
      %v367 = vadd.f32 %v366, %v335
      %v368 = vadd.f32 %v367, %v336
      %v369 = vadd.f32 %v368, %v337
      %v370 = vadd.f32 %v369, %v338
      %v371 = vadd.f32 %v370, %v339
      %v372 = vadd.f32 %v371, %v340
      %v373 = vadd.f32 %v372, %v341
      %v374 = vadd.f32 %v373, %v342
      %v375 = vadd.f32 %v374, %v343
      %v376 = vadd.f32 %v375, %v344
      %v377 = vadd.f32 %v376, %v345
      %v378 = vadd.f32 %v377, %v346
      %v379 = vadd.f32 %v378, %v347
      %v380 = vadd.f32 %v379, %v348
      %v381 = vadd.f32 %v380, %v349
      %v382 = vadd.f32 %v381, %v350
      %v383 = vadd.f32 %v382, %v351
      %v384 = vadd.f32 %v383, %v352
      %v385 = vadd.f32 %v384, %v353
      %v386 = vadd.f32 %v385, %v354
      %v387 = vadd.f32 %v386, %v355
      %v388 = vadd.f32 %v387, %v356
      %v389 = vadd.f32 %v388, %v357
      %v390 = vadd.f32 %v389, %v358
      %v391 = vadd.f32 %v390, %v359
      %v392 = vadd.f32 %v360, %v391
      %393 = vst [vmem:[#allocation7] sm:$0xff] %v392
    $region25: #{tpu_custom_call.1} parent=1 // pred_fallthru
      _
    %p394 = scmp.lt.s32.totalorder %s66, 250
    %p395 = scmp.gt.s32.totalorder %s67, 250
    %p396 = pnand %p394, %p395
    %p397 = pneg %p396
    // Predicated region
    $region26: #{tpu_custom_call.1} parent=1 // pred_check
      _
    $region27: #{tpu_custom_call.1} parent=1 // pred_check_branch
      %399 = sbr.rel (%p396) target = $region29
    $region28: #{tpu_custom_call.1} parent=1 // pred_region
      %v400 = vld [vmem:[#allocation5] sm:$0xff]
      %v401 = vld [vmem:[#allocation5 + $0x8] sm:$0xff]
      %v402 = vld [vmem:[#allocation5 + $0x10] sm:$0xff]
      %v403 = vld [vmem:[#allocation5 + $0x18] sm:$0xff]
      %v404 = vld [vmem:[#allocation5 + $0x20] sm:$0xff]
      %v405 = vld [vmem:[#allocation5 + $0x28] sm:$0xff]
      %v406 = vld [vmem:[#allocation5 + $0x30] sm:$0xff]
      %v407 = vld [vmem:[#allocation5 + $0x38] sm:$0xff]
      %v408 = vld [vmem:[#allocation5 + $0x40] sm:$0xff]
      %v409 = vld [vmem:[#allocation5 + $0x48] sm:$0xff]
      %v410 = vld [vmem:[#allocation5 + $0x50] sm:$0xff]
      %v411 = vld [vmem:[#allocation5 + $0x58] sm:$0xff]
      %v412 = vld [vmem:[#allocation5 + $0x60] sm:$0xff]
      %v413 = vld [vmem:[#allocation5 + $0x68] sm:$0xff]
      %v414 = vld [vmem:[#allocation5 + $0x70] sm:$0xff]
      %v415 = vld [vmem:[#allocation5 + $0x78] sm:$0xff]
      %v416 = vld [vmem:[#allocation5 + $0x80] sm:$0xff]
      %v417 = vld [vmem:[#allocation5 + $0x88] sm:$0xff]
      %v418 = vld [vmem:[#allocation5 + $0x90] sm:$0xff]
      %v419 = vld [vmem:[#allocation5 + $0x98] sm:$0xff]
      %v420 = vld [vmem:[#allocation5 + $0xa0] sm:$0xff]
      %v421 = vld [vmem:[#allocation5 + $0xa8] sm:$0xff]
      %v422 = vld [vmem:[#allocation5 + $0xb0] sm:$0xff]
      %v423 = vld [vmem:[#allocation5 + $0xb8] sm:$0xff]
      %v424 = vld [vmem:[#allocation5 + $0xc0] sm:$0xff]
      %v425 = vld [vmem:[#allocation5 + $0xc8] sm:$0xff]
      %v426 = vld [vmem:[#allocation5 + $0xd0] sm:$0xff]
      %v427 = vld [vmem:[#allocation5 + $0xd8] sm:$0xff]
      %v428 = vld [vmem:[#allocation5 + $0xe0] sm:$0xff]
      %v429 = vld [vmem:[#allocation5 + $0xe8] sm:$0xff]
      %v430 = vld [vmem:[#allocation5 + $0xf0] sm:$0xff]
      %v431 = vld [vmem:[#allocation5 + $0xf8] sm:$0xff]
      %v432 = vld [vmem:[#allocation2] sm:$0xff]
      %v433 = vld [vmem:[#allocation2 + $0x8] sm:$0xff]
      %v434 = vld [vmem:[#allocation2 + $0x10] sm:$0xff]
      %v435 = vld [vmem:[#allocation2 + $0x18] sm:$0xff]
      %v436 = vld [vmem:[#allocation2 + $0x20] sm:$0xff]
      %v437 = vld [vmem:[#allocation2 + $0x28] sm:$0xff]
      %v438 = vld [vmem:[#allocation2 + $0x30] sm:$0xff]
      %v439 = vld [vmem:[#allocation2 + $0x38] sm:$0xff]
      %v440 = vld [vmem:[#allocation2 + $0x40] sm:$0xff]
      %v441 = vld [vmem:[#allocation2 + $0x48] sm:$0xff]
      %v442 = vld [vmem:[#allocation2 + $0x50] sm:$0xff]
      %v443 = vld [vmem:[#allocation2 + $0x58] sm:$0xff]
      %v444 = vld [vmem:[#allocation2 + $0x60] sm:$0xff]
      %v445 = vld [vmem:[#allocation2 + $0x68] sm:$0xff]
      %v446 = vld [vmem:[#allocation2 + $0x70] sm:$0xff]
      %v447 = vld [vmem:[#allocation2 + $0x78] sm:$0xff]
      %v448 = vld [vmem:[#allocation2 + $0x80] sm:$0xff]
      %v449 = vld [vmem:[#allocation2 + $0x88] sm:$0xff]
      %v450 = vld [vmem:[#allocation2 + $0x90] sm:$0xff]
      %v451 = vld [vmem:[#allocation2 + $0x98] sm:$0xff]
      %v452 = vld [vmem:[#allocation2 + $0xa0] sm:$0xff]
      %v453 = vld [vmem:[#allocation2 + $0xa8] sm:$0xff]
      %v454 = vld [vmem:[#allocation2 + $0xb0] sm:$0xff]
      %v455 = vld [vmem:[#allocation2 + $0xb8] sm:$0xff]
      %v456 = vld [vmem:[#allocation2 + $0xc0] sm:$0xff]
      %v457 = vld [vmem:[#allocation2 + $0xc8] sm:$0xff]
      %v458 = vld [vmem:[#allocation2 + $0xd0] sm:$0xff]
      %v459 = vld [vmem:[#allocation2 + $0xd8] sm:$0xff]
      %v460 = vld [vmem:[#allocation2 + $0xe0] sm:$0xff]
      %v461 = vld [vmem:[#allocation2 + $0xe8] sm:$0xff]
      %v462 = vld [vmem:[#allocation2 + $0xf0] sm:$0xff]
      %v463 = vld [vmem:[#allocation2 + $0xf8] sm:$0xff]
      %v464 = vsub.f32 %v400, %v432
      %v465 = vsub.f32 %v401, %v433
      %v466 = vsub.f32 %v402, %v434
      %v467 = vsub.f32 %v403, %v435
      %v468 = vsub.f32 %v404, %v436
      %v469 = vsub.f32 %v405, %v437
      %v470 = vsub.f32 %v406, %v438
      %v471 = vsub.f32 %v407, %v439
      %v472 = vsub.f32 %v408, %v440
      %v473 = vsub.f32 %v409, %v441
      %v474 = vsub.f32 %v410, %v442
      %v475 = vsub.f32 %v411, %v443
      %v476 = vsub.f32 %v412, %v444
      %v477 = vsub.f32 %v413, %v445
      %v478 = vsub.f32 %v414, %v446
      %v479 = vsub.f32 %v415, %v447
      %v480 = vsub.f32 %v416, %v448
      %v481 = vsub.f32 %v417, %v449
      %v482 = vsub.f32 %v418, %v450
      %v483 = vsub.f32 %v419, %v451
      %v484 = vsub.f32 %v420, %v452
      %v485 = vsub.f32 %v421, %v453
      %v486 = vsub.f32 %v422, %v454
      %v487 = vsub.f32 %v423, %v455
      %v488 = vsub.f32 %v424, %v456
      %v489 = vsub.f32 %v425, %v457
      %v490 = vsub.f32 %v426, %v458
      %v491 = vsub.f32 %v427, %v459
      %v492 = vsub.f32 %v428, %v460
      %v493 = vsub.f32 %v429, %v461
      %v494 = vsub.f32 %v430, %v462
      %v495 = vsub.f32 %v431, %v463
      %v496 = vand.u32 2147483647, %v464
      %v497 = vand.u32 2147483647, %v465
      %v498 = vand.u32 2147483647, %v466
      %v499 = vand.u32 2147483647, %v467
      %v500 = vand.u32 2147483647, %v468
      %v501 = vand.u32 2147483647, %v469
      %v502 = vand.u32 2147483647, %v470
      %v503 = vand.u32 2147483647, %v471
      %v504 = vand.u32 2147483647, %v472
      %v505 = vand.u32 2147483647, %v473
      %v506 = vand.u32 2147483647, %v474
      %v507 = vand.u32 2147483647, %v475
      %v508 = vand.u32 2147483647, %v476
      %v509 = vand.u32 2147483647, %v477
      %v510 = vand.u32 2147483647, %v478
      %v511 = vand.u32 2147483647, %v479
      %v512 = vand.u32 2147483647, %v480
      %v513 = vand.u32 2147483647, %v481
      %v514 = vand.u32 2147483647, %v482
      %v515 = vand.u32 2147483647, %v483
      %v516 = vand.u32 2147483647, %v484
      %v517 = vand.u32 2147483647, %v485
      %v518 = vand.u32 2147483647, %v486
      %v519 = vand.u32 2147483647, %v487
      %v520 = vand.u32 2147483647, %v488
      %v521 = vand.u32 2147483647, %v489
      %v522 = vand.u32 2147483647, %v490
      %v523 = vand.u32 2147483647, %v491
      %v524 = vand.u32 2147483647, %v492
      %v525 = vand.u32 2147483647, %v493
      %v526 = vand.u32 2147483647, %v494
      %v527 = vand.u32 2147483647, %v495
      %vm528 = vcmp.le.f32.partialorder %v496, 0.001
      %vm529 = vcmp.le.f32.partialorder %v497, 0.001
      %vm530 = vcmp.le.f32.partialorder %v498, 0.001
      %vm531 = vcmp.le.f32.partialorder %v499, 0.001
      %vm532 = vcmp.le.f32.partialorder %v500, 0.001
      %vm533 = vcmp.le.f32.partialorder %v501, 0.001
      %vm534 = vcmp.le.f32.partialorder %v502, 0.001
      %vm535 = vcmp.le.f32.partialorder %v503, 0.001
      %vm536 = vcmp.le.f32.partialorder %v504, 0.001
      %vm537 = vcmp.le.f32.partialorder %v505, 0.001
      %vm538 = vcmp.le.f32.partialorder %v506, 0.001
      %vm539 = vcmp.le.f32.partialorder %v507, 0.001
      %vm540 = vcmp.le.f32.partialorder %v508, 0.001
      %vm541 = vcmp.le.f32.partialorder %v509, 0.001
      %vm542 = vcmp.le.f32.partialorder %v510, 0.001
      %vm543 = vcmp.le.f32.partialorder %v511, 0.001
      %vm544 = vcmp.le.f32.partialorder %v512, 0.001
      %vm545 = vcmp.le.f32.partialorder %v513, 0.001
      %vm546 = vcmp.le.f32.partialorder %v514, 0.001
      %vm547 = vcmp.le.f32.partialorder %v515, 0.001
      %vm548 = vcmp.le.f32.partialorder %v516, 0.001
      %vm549 = vcmp.le.f32.partialorder %v517, 0.001
      %vm550 = vcmp.le.f32.partialorder %v518, 0.001
      %vm551 = vcmp.le.f32.partialorder %v519, 0.001
      %vm552 = vcmp.le.f32.partialorder %v520, 0.001
      %vm553 = vcmp.le.f32.partialorder %v521, 0.001
      %vm554 = vcmp.le.f32.partialorder %v522, 0.001
      %vm555 = vcmp.le.f32.partialorder %v523, 0.001
      %vm556 = vcmp.le.f32.partialorder %v524, 0.001
      %vm557 = vcmp.le.f32.partialorder %v525, 0.001
      %vm558 = vcmp.le.f32.partialorder %v526, 0.001
      %vm559 = vcmp.le.f32.partialorder %v527, 0.001
      %v560 = vsel %vm528, 0.06, 0.6
      %v561 = vsel %vm529, 0.06, 0.6
      %v562 = vsel %vm530, 0.06, 0.6
      %v563 = vsel %vm531, 0.06, 0.6
      %v564 = vsel %vm532, 0.06, 0.6
      %v565 = vsel %vm533, 0.06, 0.6
      %v566 = vsel %vm534, 0.06, 0.6
      %v567 = vsel %vm535, 0.06, 0.6
      %v568 = vsel %vm536, 0.06, 0.6
      %v569 = vsel %vm537, 0.06, 0.6
      %v570 = vsel %vm538, 0.06, 0.6
      %v571 = vsel %vm539, 0.06, 0.6
      %v572 = vsel %vm540, 0.06, 0.6
      %v573 = vsel %vm541, 0.06, 0.6
      %v574 = vsel %vm542, 0.06, 0.6
      %v575 = vsel %vm543, 0.06, 0.6
      %v576 = vsel %vm544, 0.06, 0.6
      %v577 = vsel %vm545, 0.06, 0.6
      %v578 = vsel %vm546, 0.06, 0.6
      %v579 = vsel %vm547, 0.06, 0.6
      %v580 = vsel %vm548, 0.06, 0.6
      %v581 = vsel %vm549, 0.06, 0.6
      %v582 = vsel %vm550, 0.06, 0.6
      %v583 = vsel %vm551, 0.06, 0.6
      %v584 = vsel %vm552, 0.06, 0.6
      %v585 = vsel %vm553, 0.06, 0.6
      %v586 = vsel %vm554, 0.06, 0.6
      %v587 = vsel %vm555, 0.06, 0.6
      %v588 = vsel %vm556, 0.06, 0.6
      %v589 = vsel %vm557, 0.06, 0.6
      %v590 = vsel %vm558, 0.06, 0.6
      %v591 = vsel %vm559, 0.06, 0.6
      %v592 = vmul.f32 %v464, %v560
      %v593 = vmul.f32 %v465, %v561
      %v594 = vmul.f32 %v466, %v562
      %v595 = vmul.f32 %v467, %v563
      %v596 = vmul.f32 %v468, %v564
      %v597 = vmul.f32 %v469, %v565
      %v598 = vmul.f32 %v470, %v566
      %v599 = vmul.f32 %v471, %v567
      %v600 = vmul.f32 %v472, %v568
      %v601 = vmul.f32 %v473, %v569
      %v602 = vmul.f32 %v474, %v570
      %v603 = vmul.f32 %v475, %v571
      %v604 = vmul.f32 %v476, %v572
      %v605 = vmul.f32 %v477, %v573
      %v606 = vmul.f32 %v478, %v574
      %v607 = vmul.f32 %v479, %v575
      %v608 = vmul.f32 %v480, %v576
      %v609 = vmul.f32 %v481, %v577
      %v610 = vmul.f32 %v482, %v578
      %v611 = vmul.f32 %v483, %v579
      %v612 = vmul.f32 %v484, %v580
      %v613 = vmul.f32 %v485, %v581
      %v614 = vmul.f32 %v486, %v582
      %v615 = vmul.f32 %v487, %v583
      %v616 = vmul.f32 %v488, %v584
      %v617 = vmul.f32 %v489, %v585
      %v618 = vmul.f32 %v490, %v586
      %v619 = vmul.f32 %v491, %v587
      %v620 = vmul.f32 %v492, %v588
      %v621 = vmul.f32 %v493, %v589
      %v622 = vmul.f32 %v494, %v590
      %v623 = vmul.f32 %v495, %v591
      %v624 = vmin.f32 %v464, 0.0
      %v625 = vmin.f32 %v465, 0.0
      %v626 = vmin.f32 %v466, 0.0
      %v627 = vmin.f32 %v467, 0.0
      %v628 = vmin.f32 %v468, 0.0
      %v629 = vmin.f32 %v469, 0.0
      %v630 = vmin.f32 %v470, 0.0
      %v631 = vmin.f32 %v471, 0.0
      %v632 = vmin.f32 %v472, 0.0
      %v633 = vmin.f32 %v473, 0.0
      %v634 = vmin.f32 %v474, 0.0
      %v635 = vmin.f32 %v475, 0.0
      %v636 = vmin.f32 %v476, 0.0
      %v637 = vmin.f32 %v477, 0.0
      %v638 = vmin.f32 %v478, 0.0
      %v639 = vmin.f32 %v479, 0.0
      %v640 = vmin.f32 %v480, 0.0
      %v641 = vmin.f32 %v481, 0.0
      %v642 = vmin.f32 %v482, 0.0
      %v643 = vmin.f32 %v483, 0.0
      %v644 = vmin.f32 %v484, 0.0
      %v645 = vmin.f32 %v485, 0.0
      %v646 = vmin.f32 %v486, 0.0
      %v647 = vmin.f32 %v487, 0.0
      %v648 = vmin.f32 %v488, 0.0
      %v649 = vmin.f32 %v489, 0.0
      %v650 = vmin.f32 %v490, 0.0
      %v651 = vmin.f32 %v491, 0.0
      %v652 = vmin.f32 %v492, 0.0
      %v653 = vmin.f32 %v493, 0.0
      %v654 = vmin.f32 %v494, 0.0
      %v655 = vmin.f32 %v495, 0.0
      %v656 = vsub.f32 %v592, %v624
      %v657 = vsub.f32 %v593, %v625
      %v658 = vsub.f32 %v594, %v626
      %v659 = vsub.f32 %v595, %v627
      %v660 = vsub.f32 %v596, %v628
      %v661 = vsub.f32 %v597, %v629
      %v662 = vsub.f32 %v598, %v630
      %v663 = vsub.f32 %v599, %v631
      %v664 = vsub.f32 %v600, %v632
      %v665 = vsub.f32 %v601, %v633
      %v666 = vsub.f32 %v602, %v634
      %v667 = vsub.f32 %v603, %v635
      %v668 = vsub.f32 %v604, %v636
      %v669 = vsub.f32 %v605, %v637
      %v670 = vsub.f32 %v606, %v638
      %v671 = vsub.f32 %v607, %v639
      %v672 = vsub.f32 %v608, %v640
      %v673 = vsub.f32 %v609, %v641
      %v674 = vsub.f32 %v610, %v642
      %v675 = vsub.f32 %v611, %v643
      %v676 = vsub.f32 %v612, %v644
      %v677 = vsub.f32 %v613, %v645
      %v678 = vsub.f32 %v614, %v646
      %v679 = vsub.f32 %v615, %v647
      %v680 = vsub.f32 %v616, %v648
      %v681 = vsub.f32 %v617, %v649
      %v682 = vsub.f32 %v618, %v650
      %v683 = vsub.f32 %v619, %v651
      %v684 = vsub.f32 %v620, %v652
      %v685 = vsub.f32 %v621, %v653
      %v686 = vsub.f32 %v622, %v654
      %v687 = vsub.f32 %v623, %v655
      %v688 = vlaneseq
      %v689 = vshrl.u32 %v688, 7
      %v690 = vadd.s32 %v689, 8
      %v691 = vadd.s32 %v689, 16
      %v692 = vadd.s32 %v689, 24
      %v693 = vadd.s32 %v689, 32
      %v694 = vadd.s32 %v689, 40
      %v695 = vadd.s32 %v689, 48
      %v696 = vadd.s32 %v689, 56
      %v697 = vadd.s32 %v689, 64
      %v698 = vadd.s32 %v689, 72
      %v699 = vadd.s32 %v689, 80
      %v700 = vadd.s32 %v689, 88
      %v701 = vadd.s32 %v689, 96
      %v702 = vadd.s32 %v689, 104
      %v703 = vadd.s32 %v689, 112
      %v704 = vadd.s32 %v689, 120
      %v705 = vadd.s32 %v689, 128
      %v706 = vadd.s32 %v689, 136
      %v707 = vadd.s32 %v689, 144
      %v708 = vadd.s32 %v689, 152
      %v709 = vadd.s32 %v689, 160
      %v710 = vadd.s32 %v689, 168
      %v711 = vadd.s32 %v689, 176
      %v712 = vadd.s32 %v689, 184
      %v713 = vadd.s32 %v689, 192
      %v714 = vadd.s32 %v689, 200
      %v715 = vadd.s32 %v689, 208
      %v716 = vadd.s32 %v689, 216
      %v717 = vadd.s32 %v689, 224
      %v718 = vadd.s32 %v689, 232
      %v719 = vadd.s32 %v689, 240
      %v720 = vadd.s32 %v689, 248
      %v721 = vstv %s66
      %v722 = vadd.s32 %v721, %v689
      %v723 = vadd.s32 %v721, %v690
      %v724 = vadd.s32 %v721, %v691
      %v725 = vadd.s32 %v721, %v692
      %v726 = vadd.s32 %v721, %v693
      %v727 = vadd.s32 %v721, %v694
      %v728 = vadd.s32 %v721, %v695
      %v729 = vadd.s32 %v721, %v696
      %v730 = vadd.s32 %v721, %v697
      %v731 = vadd.s32 %v721, %v698
      %v732 = vadd.s32 %v721, %v699
      %v733 = vadd.s32 %v721, %v700
      %v734 = vadd.s32 %v721, %v701
      %v735 = vadd.s32 %v721, %v702
      %v736 = vadd.s32 %v721, %v703
      %v737 = vadd.s32 %v721, %v704
      %v738 = vadd.s32 %v721, %v705
      %v739 = vadd.s32 %v721, %v706
      %v740 = vadd.s32 %v721, %v707
      %v741 = vadd.s32 %v721, %v708
      %v742 = vadd.s32 %v721, %v709
      %v743 = vadd.s32 %v721, %v710
      %v744 = vadd.s32 %v721, %v711
      %v745 = vadd.s32 %v721, %v712
      %v746 = vadd.s32 %v721, %v713
      %v747 = vadd.s32 %v721, %v714
      %v748 = vadd.s32 %v721, %v715
      %v749 = vadd.s32 %v721, %v716
      %v750 = vadd.s32 %v721, %v717
      %v751 = vadd.s32 %v721, %v718
      %v752 = vadd.s32 %v721, %v719
      %v753 = vadd.s32 %v721, %v720
      %vm754 = vcmp.lt.s32.totalorder %v722, 250
      %vm755 = vcmp.lt.s32.totalorder %v723, 250
      %vm756 = vcmp.lt.s32.totalorder %v724, 250
      %vm757 = vcmp.lt.s32.totalorder %v725, 250
      %vm758 = vcmp.lt.s32.totalorder %v726, 250
      %vm759 = vcmp.lt.s32.totalorder %v727, 250
      %vm760 = vcmp.lt.s32.totalorder %v728, 250
      %vm761 = vcmp.lt.s32.totalorder %v729, 250
      %vm762 = vcmp.lt.s32.totalorder %v730, 250
      %vm763 = vcmp.lt.s32.totalorder %v731, 250
      %vm764 = vcmp.lt.s32.totalorder %v732, 250
      %vm765 = vcmp.lt.s32.totalorder %v733, 250
      %vm766 = vcmp.lt.s32.totalorder %v734, 250
      %vm767 = vcmp.lt.s32.totalorder %v735, 250
      %vm768 = vcmp.lt.s32.totalorder %v736, 250
      %vm769 = vcmp.lt.s32.totalorder %v737, 250
      %vm770 = vcmp.lt.s32.totalorder %v738, 250
      %vm771 = vcmp.lt.s32.totalorder %v739, 250
      %vm772 = vcmp.lt.s32.totalorder %v740, 250
      %vm773 = vcmp.lt.s32.totalorder %v741, 250
      %vm774 = vcmp.lt.s32.totalorder %v742, 250
      %vm775 = vcmp.lt.s32.totalorder %v743, 250
      %vm776 = vcmp.lt.s32.totalorder %v744, 250
      %vm777 = vcmp.lt.s32.totalorder %v745, 250
      %vm778 = vcmp.lt.s32.totalorder %v746, 250
      %vm779 = vcmp.lt.s32.totalorder %v747, 250
      %vm780 = vcmp.lt.s32.totalorder %v748, 250
      %vm781 = vcmp.lt.s32.totalorder %v749, 250
      %vm782 = vcmp.lt.s32.totalorder %v750, 250
      %vm783 = vcmp.lt.s32.totalorder %v751, 250
      %vm784 = vcmp.lt.s32.totalorder %v752, 250
      %vm785 = vcmp.lt.s32.totalorder %v753, 250
      %v786 = vsel %vm754, %v656, 0.0
      %v787 = vsel %vm755, %v657, 0.0
      %v788 = vsel %vm756, %v658, 0.0
      %v789 = vsel %vm757, %v659, 0.0
      %v790 = vsel %vm758, %v660, 0.0
      %v791 = vsel %vm759, %v661, 0.0
      %v792 = vsel %vm760, %v662, 0.0
      %v793 = vsel %vm761, %v663, 0.0
      %v794 = vsel %vm762, %v664, 0.0
      %v795 = vsel %vm763, %v665, 0.0
      %v796 = vsel %vm764, %v666, 0.0
      %v797 = vsel %vm765, %v667, 0.0
      %v798 = vsel %vm766, %v668, 0.0
      %v799 = vsel %vm767, %v669, 0.0
      %v800 = vsel %vm768, %v670, 0.0
      %v801 = vsel %vm769, %v671, 0.0
      %v802 = vsel %vm770, %v672, 0.0
      %v803 = vsel %vm771, %v673, 0.0
      %v804 = vsel %vm772, %v674, 0.0
      %v805 = vsel %vm773, %v675, 0.0
      %v806 = vsel %vm774, %v676, 0.0
      %v807 = vsel %vm775, %v677, 0.0
      %v808 = vsel %vm776, %v678, 0.0
      %v809 = vsel %vm777, %v679, 0.0
      %v810 = vsel %vm778, %v680, 0.0
      %v811 = vsel %vm779, %v681, 0.0
      %v812 = vsel %vm780, %v682, 0.0
      %v813 = vsel %vm781, %v683, 0.0
      %v814 = vsel %vm782, %v684, 0.0
      %v815 = vsel %vm783, %v685, 0.0
      %v816 = vsel %vm784, %v686, 0.0
      %v817 = vsel %vm785, %v687, 0.0
      %v818 = vld [vmem:[#allocation7] sm:$0xff]
      %v819 = vadd.f32 %v786, %v787
      %v820 = vadd.f32 %v819, %v788
      %v821 = vadd.f32 %v820, %v789
      %v822 = vadd.f32 %v821, %v790
      %v823 = vadd.f32 %v822, %v791
      %v824 = vadd.f32 %v823, %v792
      %v825 = vadd.f32 %v824, %v793
      %v826 = vadd.f32 %v825, %v794
      %v827 = vadd.f32 %v826, %v795
      %v828 = vadd.f32 %v827, %v796
      %v829 = vadd.f32 %v828, %v797
      %v830 = vadd.f32 %v829, %v798
      %v831 = vadd.f32 %v830, %v799
      %v832 = vadd.f32 %v831, %v800
      %v833 = vadd.f32 %v832, %v801
      %v834 = vadd.f32 %v833, %v802
      %v835 = vadd.f32 %v834, %v803
      %v836 = vadd.f32 %v835, %v804
      %v837 = vadd.f32 %v836, %v805
      %v838 = vadd.f32 %v837, %v806
      %v839 = vadd.f32 %v838, %v807
      %v840 = vadd.f32 %v839, %v808
      %v841 = vadd.f32 %v840, %v809
      %v842 = vadd.f32 %v841, %v810
      %v843 = vadd.f32 %v842, %v811
      %v844 = vadd.f32 %v843, %v812
      %v845 = vadd.f32 %v844, %v813
      %v846 = vadd.f32 %v845, %v814
      %v847 = vadd.f32 %v846, %v815
      %v848 = vadd.f32 %v847, %v816
      %v849 = vadd.f32 %v848, %v817
      %v850 = vadd.f32 %v818, %v849
      %851 = vst [vmem:[#allocation7] sm:$0xff] %v850
    $region29: #{tpu_custom_call.1} parent=1 // pred_fallthru
      _
    // Predicated region
    $region30: #{tpu_custom_call.1} parent=1 // pred_check
      _
    $region31: #{tpu_custom_call.1} parent=1 // pred_check_branch
      %853 = sbr.rel (0) target = $region33
    $region32: #{tpu_custom_call.1} parent=1 // pred_region
      %s855 = ssub.s32 128, 128
      %856 = vsyncadd [#allocation4], %s855
      %s858 = sshll.u32 [#allocation7], 4
      %s859 = int_to_ptr.vmem [resolvable:$true] %s858
      %861 = dma.vmem_to_hbm [thread:$0]  %s859, 128, %s2, [#allocation4]
    $region33: #{tpu_custom_call.1} parent=1 // pred_fallthru
      _
    // Predicated region
    $region34: #{tpu_custom_call.1} parent=1 // pred_check
      _
    $region35: #{tpu_custom_call.1} parent=1 // pred_check_branch
      %863 = sbr.rel (0) target = $region37
    $region36: #{tpu_custom_call.1} parent=1 // pred_region
      %864 = dma.done [#allocation4], 128
    $region37: #{tpu_custom_call.1} parent=1 // pred_fallthru
      _
    %865 = vsyncpa [#allocation3], 1
    %866 = vsyncpa [#allocation6], 1
    %867 = vsyncpa [#allocation4], 1

</llo_original>
